<compile_context>
chip_gen: v6e
topology: v6e:2x2x1
jax: 0.10.0
libtpu: 0.0.40
codegen_flags: <defaults>
</compile_context>

<pallas_src>
import functools

import jax
import jax.numpy as jnp
from jax.experimental import pallas as pl
from jax.experimental.pallas import tpu as pltpu

EPS = 1e-5  # PyTorch BatchNorm2d default eps


def basic_block_kernel(x_ref, w1b_ref, w2b_ref, wsb_ref, bias_ref, o_ref,
                       *, img_h, mm_dtype):
    """Fused BasicBlock forward on lane-dense (N*H, W*C) slabs.

    x_ref    : (N*H, W*Cin)        input slab (mm_dtype)
    w1b_ref  : (3, W*Cin,  W*Cmid) per-kh banded conv1 weights (BN1 scale folded)
    w2b_ref  : (3, W*Cmid, W*Cout) per-kh banded conv2 weights (BN2 scale folded)
    wsb_ref  : (W*Cin,  W*Cout)    block-diagonal shortcut 1x1 weights (BN folded)
    bias_ref : (2, W*Cout) f32     row 0: BN1 bias, row 1: BN2 + shortcut-BN bias
    o_ref    : (N*H, W*Cout) f32   output slab
    """
    nh = x_ref.shape[0]
    x = x_ref[...]
    bias = bias_ref[...]
    b1 = bias[0:1, :]
    bo = bias[1:2, :]

    # Constant row-shift matrices: (s_up @ t)[r] = t[r-1] (0 at the top row of
    # each image), (s_dn @ t)[r] = t[r+1] (0 at the bottom row).  Applying them
    # on the MXU keeps the vertical conv taps off the store/XLU path entirely.
    r = jax.lax.broadcasted_iota(jnp.int32, (nh, nh), 0)
    c = jax.lax.broadcasted_iota(jnp.int32, (nh, nh), 1)
    s_up = jnp.where((c == r - 1) & ((r % img_h) != 0), 1.0, 0.0)
    s_dn = jnp.where((c == r + 1) & ((r % img_h) != (img_h - 1)), 1.0, 0.0)

    def conv3x3(inp, wband_ref):
        # Horizontal taps + W padding are inside the banded weights; vertical
        # taps + H padding are the two row-shift matmuls.
        t0 = jnp.dot(inp, wband_ref[0], preferred_element_type=jnp.float32)
        t1 = jnp.dot(inp, wband_ref[1], preferred_element_type=jnp.float32)
        t2 = jnp.dot(inp, wband_ref[2], preferred_element_type=jnp.float32)
        return (t1
                + jnp.dot(s_up, t0, preferred_element_type=jnp.float32)
                + jnp.dot(s_dn, t2, preferred_element_type=jnp.float32))

    # path_b: conv1 (BN1 scale folded) + bias -> ReLU
    y = jnp.maximum(conv3x3(x, w1b_ref) + b1, 0.0)
    # conv2 (BN2 scale folded)
    acc = conv3x3(y.astype(mm_dtype), w2b_ref)
    # path_a: 1x1 shortcut conv (shortcut BN scale folded)
    acc = acc + jnp.dot(x, wsb_ref[...], preferred_element_type=jnp.float32)
    # combined BN2 + shortcut-BN bias; single fully lane-dense store.
    o_ref[...] = (acc + bo).astype(o_ref.dtype)


def _fold_bn(gamma, beta, mean, var):
    scale = gamma / jnp.sqrt(var + EPS)
    bias = beta - mean * scale
    return scale, bias


def _band_weights(w_hwio, width):
    """(3, 3, Ci, Co) HWIO -> (3, width*Ci, width*Co) per-kh banded matrices.

    band[kh][wi*Ci+ci, wo*Co+co] = w[kh, wi-wo+1, ci, co] for |wi-wo| <= 1 else 0
    (the zero band edges implement the pad-1 zero padding along W).
    """
    kw = jnp.arange(3)[:, None, None]
    wi = jnp.arange(width)[None, :, None]
    wo = jnp.arange(width)[None, None, :]
    ind = (wi == wo + kw - 1).astype(jnp.float32)          # (3, W, W)
    band = jnp.einsum("kab,hkio->haibo", ind, w_hwio)      # (3, W, Ci, W, Co)
    _, _, ci, _, co = band.shape
    return band.reshape(3, width * ci, width * co)


@functools.partial(jax.jit, static_argnames=("use_bf16",))
def basic_block_forward(x_nchw, params, use_bf16=True):
    """x_nchw: (N, Cin, H, W) float32. Returns (N, Cout, H, W) float32."""
    n, cin, h, w = x_nchw.shape
    cmid = params["w1"].shape[0]
    cout = params["w2"].shape[0]
    assert cmid == cout  # BasicBlock.expansion == 1

    mm_dtype = jnp.bfloat16 if use_bf16 else jnp.float32

    # Fold inference-mode BN into per-channel scale/bias, then fold the scales
    # into the conv weights so the kernel only performs bias adds.
    s1, b1 = _fold_bn(params["g1"], params["be1"], params["m1"], params["v1"])
    s2, b2 = _fold_bn(params["g2"], params["be2"], params["m2"], params["v2"])
    ss, bs = _fold_bn(params["gs"], params["bes"], params["ms"], params["vs"])

    w1 = jnp.transpose(params["w1"], (2, 3, 1, 0)) * s1         # (3,3,Cin,Cmid)
    w2 = jnp.transpose(params["w2"], (2, 3, 1, 0)) * s2         # (3,3,Cmid,Cout)
    ws = jnp.transpose(params["ws"][:, :, 0, 0], (1, 0)) * ss   # (Cin,Cout)

    w1b = _band_weights(w1, w).astype(mm_dtype)                 # (3, W*Cin,  W*Cmid)
    w2b = _band_weights(w2, w).astype(mm_dtype)                 # (3, W*Cmid, W*Cout)
    wsb = jnp.einsum("ab,io->aibo", jnp.eye(w, dtype=jnp.float32), ws)
    wsb = wsb.reshape(w * cin, w * cout).astype(mm_dtype)       # block-diagonal 1x1

    # The only remaining per-channel terms, packed into one small operand.
    bias = jnp.stack([jnp.tile(b1, w), jnp.tile(b2 + bs, w)]).astype(jnp.float32)

    # Lane-dense activation slab (N*H, W*Cin); output slab (N*H, W*Cout) is
    # (32, 128) here, i.e. full 128-lane unmasked stores.
    x_slab = jnp.transpose(x_nchw, (0, 2, 3, 1)).reshape(n * h, w * cin)
    x_slab = x_slab.astype(mm_dtype)

    vmem = pl.BlockSpec(memory_space=pltpu.MemorySpace.VMEM)
    out_slab = pl.pallas_call(
        functools.partial(basic_block_kernel, img_h=h, mm_dtype=mm_dtype),
        out_shape=jax.ShapeDtypeStruct((n * h, w * cout), jnp.float32),
        in_specs=[vmem] * 5,
        out_specs=vmem,
    )(x_slab, w1b, w2b, wsb, bias)

    # Back to the PyTorch NCHW convention.
    return jnp.transpose(out_slab.reshape(n, h, w, cout), (0, 3, 1, 2))


def reference_forward(x, p):
    """Pure-JAX (XLA conv) f32 reference of BasicBlock.forward (eval-mode BN)."""
    def conv(inp, wt, padding):
        return jax.lax.conv_general_dilated(
            inp, wt, window_strides=(1, 1),
            padding=((padding, padding), (padding, padding)),
            dimension_numbers=("NCHW", "OIHW", "NCHW"),
            precision=jax.lax.Precision.HIGHEST)

    def bn(inp, g, b, m, v):
        g, b, m, v = (t[None, :, None, None] for t in (g, b, m, v))
        return (inp - m) / jnp.sqrt(v + EPS) * g + b

    hb = conv(x, p["w1"], 1)
    hb = jnp.maximum(bn(hb, p["g1"], p["be1"], p["m1"], p["v1"]), 0.0)
    hb = bn(conv(hb, p["w2"], 1), p["g2"], p["be2"], p["m2"], p["v2"])
    ha = bn(conv(x, p["ws"], 0), p["gs"], p["bes"], p["ms"], p["vs"])
    return ha + hb


def init_params(key, in_planes, planes):
    """Deterministic synthetic parameters in PyTorch layouts (OIHW conv weights)."""
    ks = jax.random.split(key, 12)
    expansion = 1
    cout = expansion * planes
    return {
        "w1": 0.1 * jax.random.normal(ks[0], (planes, in_planes, 3, 3), jnp.float32),
        "g1": 1.0 + 0.1 * jax.random.normal(ks[1], (planes,), jnp.float32),
        "be1": 0.1 * jax.random.normal(ks[2], (planes,), jnp.float32),
        "m1": 0.1 * jax.random.normal(ks[3], (planes,), jnp.float32),
        "v1": jnp.abs(jax.random.normal(ks[4], (planes,), jnp.float32)) + 0.5,
        "w2": 0.1 * jax.random.normal(ks[5], (cout, planes, 3, 3), jnp.float32),
        "g2": 1.0 + 0.1 * jax.random.normal(ks[6], (cout,), jnp.float32),
        "be2": 0.1 * jax.random.normal(ks[7], (cout,), jnp.float32),
        "m2": 0.1 * jax.random.normal(ks[8], (cout,), jnp.float32),
        "v2": jnp.abs(jax.random.normal(ks[9], (cout,), jnp.float32)) + 0.5,
        "ws": 0.1 * jax.random.normal(ks[10], (cout, in_planes, 1, 1), jnp.float32),
        "gs": jnp.ones((cout,), jnp.float32),
        "bes": jnp.zeros((cout,), jnp.float32),
        "ms": jnp.zeros((cout,), jnp.float32),
        "vs": jnp.ones((cout,), jnp.float32)
              + 0.1 * jnp.abs(jax.random.normal(ks[11], (cout,), jnp.float32)),
    }


if __name__ == "__main__":
    key = jax.random.PRNGKey(0)
    k_x, k_p = jax.random.split(key)

    N, in_planes, planes, spatial = 2, 4, 8, 16
    x = jax.random.normal(k_x, (N, in_planes, spatial, spatial), jnp.float32)
    params = init_params(k_p, in_planes, planes)

    out = jax.block_until_ready(basic_block_forward(x, params))
    assert out.shape == (N, planes, spatial, spatial), out.shape

    ref = jax.block_until_ready(reference_forward(x, params))
    max_err = float(jnp.max(jnp.abs(out - ref)))
    assert jnp.allclose(out, ref, rtol=5e-2, atol=5e-2), f"max_abs_err={max_err}"

    print("KERNEL_OK")
</pallas_src>

<mosaic_0001>
module attributes {stable_mosaic.version = 11 : i64} {
  func.func @basic_block_kernel(%arg0: memref<32x64xbf16, #tpu.memory_space<vmem>>, %arg1: memref<3x64x128xbf16, #tpu.memory_space<vmem>>, %arg2: memref<3x128x128xbf16, #tpu.memory_space<vmem>>, %arg3: memref<64x128xbf16, #tpu.memory_space<vmem>>, %arg4: memref<2x128xf32, #tpu.memory_space<vmem>>, %arg5: memref<32x128xf32, #tpu.memory_space<vmem>>) attributes {dimension_semantics = [], scalar_prefetch = 0 : i64, scratch_operands = 0 : i64, tpu.core_type = #tpu.core_type<tc>} {
    %c0 = arith.constant 0 : index
    %c0_0 = arith.constant 0 : index
    %0 = vector.load %arg0[%c0, %c0_0] : memref<32x64xbf16, #tpu.memory_space<vmem>>, vector<32x64xbf16>
    %c0_1 = arith.constant 0 : index
    %c0_2 = arith.constant 0 : index
    %1 = vector.load %arg4[%c0_1, %c0_2] : memref<2x128xf32, #tpu.memory_space<vmem>>, vector<2x128xf32>
    %2 = vector.extract_strided_slice %1 {offsets = [0, 0], sizes = [1, 128], strides = [1, 1]} : vector<2x128xf32> to vector<1x128xf32>
    %3 = vector.extract_strided_slice %1 {offsets = [1, 0], sizes = [1, 128], strides = [1, 1]} : vector<2x128xf32> to vector<1x128xf32>
    %4 = tpu.iota {dimensions = array<i32: 0>} : vector<32x32xi32>
    %5 = tpu.iota {dimensions = array<i32: 1>} : vector<32x32xi32>
    %c1_i32 = arith.constant 1 : i32
    %6 = vector.broadcast %c1_i32 : i32 to vector<32x32xi32>
    %7 = arith.subi %4, %6 : vector<32x32xi32>
    %8 = arith.cmpi eq, %5, %7 : vector<32x32xi32>
    %c16_i32 = arith.constant 16 : i32
    %c0_i32 = arith.constant 0 : i32
    %9 = arith.cmpi eq, %c16_i32, %c0_i32 : i32
    %c1_i32_3 = arith.constant 1 : i32
    %10 = arith.select %9, %c1_i32_3, %c16_i32 : i32
    %11 = vector.broadcast %10 : i32 to vector<32x32xi32>
    %12 = arith.remsi %4, %11 : vector<32x32xi32>
    %c0_i32_4 = arith.constant 0 : i32
    %13 = vector.broadcast %c0_i32_4 : i32 to vector<32x32xi32>
    %14 = arith.cmpi ne, %12, %13 : vector<32x32xi32>
    %c0_i32_5 = arith.constant 0 : i32
    %15 = vector.broadcast %c0_i32_5 : i32 to vector<32x32xi32>
    %16 = arith.cmpi slt, %12, %15 : vector<32x32xi32>
    %c0_i32_6 = arith.constant 0 : i32
    %17 = arith.cmpi slt, %10, %c0_i32_6 : i32
    %18 = vector.broadcast %17 : i1 to vector<32x32xi1>
    %19 = vector.broadcast %18 : vector<32x32xi1> to vector<32x32xi1>
    %20 = arith.xori %16, %19 : vector<32x32xi1>
    %21 = arith.andi %20, %14 : vector<32x32xi1>
    %22 = vector.broadcast %10 : i32 to vector<32x32xi32>
    %23 = arith.addi %12, %22 : vector<32x32xi32>
    %24 = arith.select %21, %23, %12 : vector<32x32xi1>, vector<32x32xi32>
    %c0_i32_7 = arith.constant 0 : i32
    %25 = vector.broadcast %c0_i32_7 : i32 to vector<32x32xi32>
    %26 = arith.cmpi ne, %24, %25 : vector<32x32xi32>
    %27 = arith.andi %8, %26 : vector<32x32xi1>
    %cst = arith.constant 1.000000e+00 : f32
    %cst_8 = arith.constant 0.000000e+00 : f32
    %28 = vector.broadcast %cst : f32 to vector<32x32xf32>
    %29 = vector.broadcast %cst_8 : f32 to vector<32x32xf32>
    %30 = arith.select %27, %28, %29 : vector<32x32xi1>, vector<32x32xf32>
    %c1_i32_9 = arith.constant 1 : i32
    %31 = vector.broadcast %c1_i32_9 : i32 to vector<32x32xi32>
    %32 = arith.addi %4, %31 : vector<32x32xi32>
    %33 = arith.cmpi eq, %5, %32 : vector<32x32xi32>
    %c16_i32_10 = arith.constant 16 : i32
    %c0_i32_11 = arith.constant 0 : i32
    %34 = arith.cmpi eq, %c16_i32_10, %c0_i32_11 : i32
    %c1_i32_12 = arith.constant 1 : i32
    %35 = arith.select %34, %c1_i32_12, %c16_i32_10 : i32
    %36 = vector.broadcast %35 : i32 to vector<32x32xi32>
    %37 = arith.remsi %4, %36 : vector<32x32xi32>
    %c0_i32_13 = arith.constant 0 : i32
    %38 = vector.broadcast %c0_i32_13 : i32 to vector<32x32xi32>
    %39 = arith.cmpi ne, %37, %38 : vector<32x32xi32>
    %c0_i32_14 = arith.constant 0 : i32
    %40 = vector.broadcast %c0_i32_14 : i32 to vector<32x32xi32>
    %41 = arith.cmpi slt, %37, %40 : vector<32x32xi32>
    %c0_i32_15 = arith.constant 0 : i32
    %42 = arith.cmpi slt, %35, %c0_i32_15 : i32
    %43 = vector.broadcast %42 : i1 to vector<32x32xi1>
    %44 = vector.broadcast %43 : vector<32x32xi1> to vector<32x32xi1>
    %45 = arith.xori %41, %44 : vector<32x32xi1>
    %46 = arith.andi %45, %39 : vector<32x32xi1>
    %47 = vector.broadcast %35 : i32 to vector<32x32xi32>
    %48 = arith.addi %37, %47 : vector<32x32xi32>
    %49 = arith.select %46, %48, %37 : vector<32x32xi1>, vector<32x32xi32>
    %c15_i32 = arith.constant 15 : i32
    %50 = vector.broadcast %c15_i32 : i32 to vector<32x32xi32>
    %51 = arith.cmpi ne, %49, %50 : vector<32x32xi32>
    %52 = arith.andi %33, %51 : vector<32x32xi1>
    %cst_16 = arith.constant 1.000000e+00 : f32
    %cst_17 = arith.constant 0.000000e+00 : f32
    %53 = vector.broadcast %cst_16 : f32 to vector<32x32xf32>
    %54 = vector.broadcast %cst_17 : f32 to vector<32x32xf32>
    %55 = arith.select %52, %53, %54 : vector<32x32xi1>, vector<32x32xf32>
    %c0_18 = arith.constant 0 : index
    %c0_19 = arith.constant 0 : index
    %c0_20 = arith.constant 0 : index
    %56 = vector.load %arg1[%c0_18, %c0_19, %c0_20] : memref<3x64x128xbf16, #tpu.memory_space<vmem>>, vector<1x64x128xbf16>
    %57 = vector.shape_cast %56 : vector<1x64x128xbf16> to vector<64x128xbf16>
    %cst_21 = arith.constant dense<0.000000e+00> : vector<32x128xf32>
    %58 = tpu.matmul %0, %57, %cst_21 {dimension_numbers = #tpu.dot_dimension_numbers<[1], [0], [0], [1], [0, 0, 1, 1], [], []>} : vector<32x64xbf16>, vector<64x128xbf16>, vector<32x128xf32> -> vector<32x128xf32>
    %c1 = arith.constant 1 : index
    %c0_22 = arith.constant 0 : index
    %c0_23 = arith.constant 0 : index
    %59 = vector.load %arg1[%c1, %c0_22, %c0_23] : memref<3x64x128xbf16, #tpu.memory_space<vmem>>, vector<1x64x128xbf16>
    %60 = vector.shape_cast %59 : vector<1x64x128xbf16> to vector<64x128xbf16>
    %cst_24 = arith.constant dense<0.000000e+00> : vector<32x128xf32>
    %61 = tpu.matmul %0, %60, %cst_24 {dimension_numbers = #tpu.dot_dimension_numbers<[1], [0], [0], [1], [0, 0, 1, 1], [], []>} : vector<32x64xbf16>, vector<64x128xbf16>, vector<32x128xf32> -> vector<32x128xf32>
    %c2 = arith.constant 2 : index
    %c0_25 = arith.constant 0 : index
    %c0_26 = arith.constant 0 : index
    %62 = vector.load %arg1[%c2, %c0_25, %c0_26] : memref<3x64x128xbf16, #tpu.memory_space<vmem>>, vector<1x64x128xbf16>
    %63 = vector.shape_cast %62 : vector<1x64x128xbf16> to vector<64x128xbf16>
    %cst_27 = arith.constant dense<0.000000e+00> : vector<32x128xf32>
    %64 = tpu.matmul %0, %63, %cst_27 {dimension_numbers = #tpu.dot_dimension_numbers<[1], [0], [0], [1], [0, 0, 1, 1], [], []>} : vector<32x64xbf16>, vector<64x128xbf16>, vector<32x128xf32> -> vector<32x128xf32>
    %cst_28 = arith.constant dense<0.000000e+00> : vector<32x128xf32>
    %65 = tpu.matmul %30, %58, %cst_28 {dimension_numbers = #tpu.dot_dimension_numbers<[1], [0], [0], [1], [0, 0, 1, 1], [], []>} : vector<32x32xf32>, vector<32x128xf32>, vector<32x128xf32> -> vector<32x128xf32>
    %66 = arith.addf %61, %65 : vector<32x128xf32>
    %cst_29 = arith.constant dense<0.000000e+00> : vector<32x128xf32>
    %67 = tpu.matmul %55, %64, %cst_29 {dimension_numbers = #tpu.dot_dimension_numbers<[1], [0], [0], [1], [0, 0, 1, 1], [], []>} : vector<32x32xf32>, vector<32x128xf32>, vector<32x128xf32> -> vector<32x128xf32>
    %68 = arith.addf %66, %67 : vector<32x128xf32>
    %69 = vector.broadcast %2 : vector<1x128xf32> to vector<32x128xf32>
    %70 = arith.addf %68, %69 : vector<32x128xf32>
    %cst_30 = arith.constant 0.000000e+00 : f32
    %71 = vector.broadcast %cst_30 : f32 to vector<32x128xf32>
    %72 = arith.maximumf %70, %71 : vector<32x128xf32>
    %73 = arith.truncf %72 : vector<32x128xf32> to vector<32x128xbf16>
    %c0_31 = arith.constant 0 : index
    %c0_32 = arith.constant 0 : index
    %c0_33 = arith.constant 0 : index
    %74 = vector.load %arg2[%c0_31, %c0_32, %c0_33] : memref<3x128x128xbf16, #tpu.memory_space<vmem>>, vector<1x128x128xbf16>
    %75 = vector.shape_cast %74 : vector<1x128x128xbf16> to vector<128x128xbf16>
    %cst_34 = arith.constant dense<0.000000e+00> : vector<32x128xf32>
    %76 = tpu.matmul %73, %75, %cst_34 {dimension_numbers = #tpu.dot_dimension_numbers<[1], [0], [0], [1], [0, 0, 1, 1], [], []>} : vector<32x128xbf16>, vector<128x128xbf16>, vector<32x128xf32> -> vector<32x128xf32>
    %c1_35 = arith.constant 1 : index
    %c0_36 = arith.constant 0 : index
    %c0_37 = arith.constant 0 : index
    %77 = vector.load %arg2[%c1_35, %c0_36, %c0_37] : memref<3x128x128xbf16, #tpu.memory_space<vmem>>, vector<1x128x128xbf16>
    %78 = vector.shape_cast %77 : vector<1x128x128xbf16> to vector<128x128xbf16>
    %cst_38 = arith.constant dense<0.000000e+00> : vector<32x128xf32>
    %79 = tpu.matmul %73, %78, %cst_38 {dimension_numbers = #tpu.dot_dimension_numbers<[1], [0], [0], [1], [0, 0, 1, 1], [], []>} : vector<32x128xbf16>, vector<128x128xbf16>, vector<32x128xf32> -> vector<32x128xf32>
    %c2_39 = arith.constant 2 : index
    %c0_40 = arith.constant 0 : index
    %c0_41 = arith.constant 0 : index
    %80 = vector.load %arg2[%c2_39, %c0_40, %c0_41] : memref<3x128x128xbf16, #tpu.memory_space<vmem>>, vector<1x128x128xbf16>
    %81 = vector.shape_cast %80 : vector<1x128x128xbf16> to vector<128x128xbf16>
    %cst_42 = arith.constant dense<0.000000e+00> : vector<32x128xf32>
    %82 = tpu.matmul %73, %81, %cst_42 {dimension_numbers = #tpu.dot_dimension_numbers<[1], [0], [0], [1], [0, 0, 1, 1], [], []>} : vector<32x128xbf16>, vector<128x128xbf16>, vector<32x128xf32> -> vector<32x128xf32>
    %cst_43 = arith.constant dense<0.000000e+00> : vector<32x128xf32>
    %83 = tpu.matmul %30, %76, %cst_43 {dimension_numbers = #tpu.dot_dimension_numbers<[1], [0], [0], [1], [0, 0, 1, 1], [], []>} : vector<32x32xf32>, vector<32x128xf32>, vector<32x128xf32> -> vector<32x128xf32>
    %84 = arith.addf %79, %83 : vector<32x128xf32>
    %cst_44 = arith.constant dense<0.000000e+00> : vector<32x128xf32>
    %85 = tpu.matmul %55, %82, %cst_44 {dimension_numbers = #tpu.dot_dimension_numbers<[1], [0], [0], [1], [0, 0, 1, 1], [], []>} : vector<32x32xf32>, vector<32x128xf32>, vector<32x128xf32> -> vector<32x128xf32>
    %86 = arith.addf %84, %85 : vector<32x128xf32>
    %c0_45 = arith.constant 0 : index
    %c0_46 = arith.constant 0 : index
    %87 = vector.load %arg3[%c0_45, %c0_46] : memref<64x128xbf16, #tpu.memory_space<vmem>>, vector<64x128xbf16>
    %cst_47 = arith.constant dense<0.000000e+00> : vector<32x128xf32>
    %88 = tpu.matmul %0, %87, %cst_47 {dimension_numbers = #tpu.dot_dimension_numbers<[1], [0], [0], [1], [0, 0, 1, 1], [], []>} : vector<32x64xbf16>, vector<64x128xbf16>, vector<32x128xf32> -> vector<32x128xf32>
    %89 = arith.addf %86, %88 : vector<32x128xf32>
    %90 = vector.broadcast %3 : vector<1x128xf32> to vector<32x128xf32>
    %91 = arith.addf %89, %90 : vector<32x128xf32>
    %c0_48 = arith.constant 0 : index
    %c0_49 = arith.constant 0 : index
    %92 = vector.load %arg5[%c0_48, %c0_49] : memref<32x128xf32, #tpu.memory_space<vmem>>, vector<32x128xf32>
    tpu.vector_store %arg5[%c0_48, %c0_49], %91 {strides = array<i32>} : memref<32x128xf32, #tpu.memory_space<vmem>>, vector<32x128xf32>,
    return
  }
}

</mosaic_0001>

<llo_original>
// kernel: tile.17
$region0: #{tile.17}
  #allocation0 [shape = 's32[1]{0}', space=sflag, size = 0x4, scoped, tag = 'scoped memory for tile.17']
  %s0 = inlined_call_operand.vmem [shape: f32[8], index: 0, kind: input, shape index: {}]
  %s1 = inlined_call_operand.vmem [shape: f32[16,8], index: 1, kind: output, shape index: {}]
  // Predicated region
  $region2: #{tile.17} parent=0 // pred_check
    _
  $region3: #{tile.17} parent=0 // pred_check_branch
    %3 = sbr.rel (0) target = $region5
  $region4: #{tile.17} parent=0 // pred_region
    _
  $region5: #{tile.17} parent=0 // pred_fallthru
    _
  %v4 = vld [vmem:[%s0] ss:$0 sm:$0xff]
  %5 = vst [vmem:[%s1] sm:$0xff] %v4
  %s6 = scalar_lea.vmem %s1, 8
  %7 = vst [vmem:[%s6] sm:$0xff] %v4

// kernel: tile.19
$region0: #{tile.19}
  %s0 = inlined_call_operand.vmem [shape: f32[16,8], index: 0, kind: input, shape index: {}]
  %s1 = inlined_call_operand.vmem [shape: f32[1,128], index: 1, kind: output, shape index: {}]
  $region1: #{tile.19} parent=0
    #allocation0 [shape = 'u8[4096]{0}', space=vmem, size = 0x1000, scoped, tag = 'scoped mem for output reshape']
    %v2 = vld [vmem:[%s0] sm:$0x1]
    %vm3 = vcmask 64512
    %4 = vst.msk [vmem:[#allocation0] sm:$0x1] %vm3, %v2
    %s5 = scalar_lea.vmem %s0, 15
    %v6 = vld [vmem:[%s5] sm:$0x1]
    %7 = vrot.lane.b32.xlu0 %v6, 120
    %v8 = vpop.permute.xlu0 %7
    %vm9 = vcmask 1048512
    %10 = vst.msk [vmem:[#allocation0] sm:$0x1] %vm9, %v8
    %s11 = scalar_lea.vmem %s0, 14
    %v12 = vld [vmem:[%s11] sm:$0x1]
    %13 = vrot.lane.b32.xlu0 %v12, 112
    %v14 = vpop.permute.xlu0 %13
    %vm15 = vcmask 982912
    %16 = vst.msk [vmem:[#allocation0] sm:$0x1] %vm15, %v14
    %s17 = scalar_lea.vmem %s0, 13
    %v18 = vld [vmem:[%s17] sm:$0x1]
    %19 = vrot.lane.b32.xlu0 %v18, 104
    %v20 = vpop.permute.xlu0 %19
    %vm21 = vcmask 917312
    %22 = vst.msk [vmem:[#allocation0] sm:$0x1] %vm21, %v20
    %s23 = scalar_lea.vmem %s0, 12
    %v24 = vld [vmem:[%s23] sm:$0x1]
    %25 = vrot.lane.b32.xlu0 %v24, 96
    %v26 = vpop.permute.xlu0 %25
    %vm27 = vcmask 851712
    %28 = vst.msk [vmem:[#allocation0] sm:$0x1] %vm27, %v26
    %s29 = scalar_lea.vmem %s0, 11
    %v30 = vld [vmem:[%s29] sm:$0x1]
    %31 = vrot.lane.b32.xlu0 %v30, 88
    %v32 = vpop.permute.xlu0 %31
    %vm33 = vcmask 786112
    %34 = vst.msk [vmem:[#allocation0] sm:$0x1] %vm33, %v32
    %s35 = scalar_lea.vmem %s0, 10
    %v36 = vld [vmem:[%s35] sm:$0x1]
    %37 = vrot.lane.b32.xlu0 %v36, 80
    %v38 = vpop.permute.xlu0 %37
    %vm39 = vcmask 720512
    %40 = vst.msk [vmem:[#allocation0] sm:$0x1] %vm39, %v38
    %s41 = scalar_lea.vmem %s0, 9
    %v42 = vld [vmem:[%s41] sm:$0x1]
    %43 = vrot.lane.b32.xlu0 %v42, 72
    %v44 = vpop.permute.xlu0 %43
    %vm45 = vcmask 654912
    %46 = vst.msk [vmem:[#allocation0] sm:$0x1] %vm45, %v44
    %s47 = scalar_lea.vmem %s0, 8
    %v48 = vld [vmem:[%s47] sm:$0x1]
    %49 = vrot.lane.b32.xlu0 %v48, 64
    %v50 = vpop.permute.xlu0 %49
    %vm51 = vcmask 589312
    %52 = vst.msk [vmem:[#allocation0] sm:$0x1] %vm51, %v50
    %s53 = scalar_lea.vmem %s0, 7
    %v54 = vld [vmem:[%s53] sm:$0x1]
    %55 = vrot.lane.b32.xlu0 %v54, 56
    %v56 = vpop.permute.xlu0 %55
    %vm57 = vcmask 523712
    %58 = vst.msk [vmem:[#allocation0] sm:$0x1] %vm57, %v56
    %s59 = scalar_lea.vmem %s0, 6
    %v60 = vld [vmem:[%s59] sm:$0x1]
    %61 = vrot.lane.b32.xlu0 %v60, 48
    %v62 = vpop.permute.xlu0 %61
    %vm63 = vcmask 458112
    %64 = vst.msk [vmem:[#allocation0] sm:$0x1] %vm63, %v62
    %s65 = scalar_lea.vmem %s0, 5
    %v66 = vld [vmem:[%s65] sm:$0x1]
    %67 = vrot.lane.b32.xlu0 %v66, 40
    %v68 = vpop.permute.xlu0 %67
    %vm69 = vcmask 392512
    %70 = vst.msk [vmem:[#allocation0] sm:$0x1] %vm69, %v68
    %s71 = scalar_lea.vmem %s0, 4
    %v72 = vld [vmem:[%s71] sm:$0x1]
    %73 = vrot.lane.b32.xlu0 %v72, 32
    %v74 = vpop.permute.xlu0 %73
    %vm75 = vcmask 326912
    %76 = vst.msk [vmem:[#allocation0] sm:$0x1] %vm75, %v74
    %s77 = scalar_lea.vmem %s0, 3
    %v78 = vld [vmem:[%s77] sm:$0x1]
    %79 = vrot.lane.b32.xlu0 %v78, 24
    %v80 = vpop.permute.xlu0 %79
    %vm81 = vcmask 261312
    %82 = vst.msk [vmem:[#allocation0] sm:$0x1] %vm81, %v80
    %s83 = scalar_lea.vmem %s0, 2
    %v84 = vld [vmem:[%s83] sm:$0x1]
    %85 = vrot.lane.b32.xlu0 %v84, 16
    %v86 = vpop.permute.xlu0 %85
    %vm87 = vcmask 195712
    %88 = vst.msk [vmem:[#allocation0] sm:$0x1] %vm87, %v86
    %s89 = scalar_lea.vmem %s0, 1
    %v90 = vld [vmem:[%s89] sm:$0x1]
    %91 = vrot.lane.b32.xlu0 %v90, 8
    %v92 = vpop.permute.xlu0 %91
    %vm93 = vcmask 130112
    %94 = vst.msk [vmem:[#allocation0] sm:$0x1] %vm93, %v92
    %s96 = sshll.u32 1, 1
    %s97 = ssub.s32 %s96, 1
    %v99 = vld [vmem:[#allocation0] sm:%s97]
    %s100 = sshll.u32 1, 1
    %s101 = ssub.s32 %s100, 1
    %102 = vst [vmem:[%s1] sm:%s101] %v99

// kernel: basic_block_forward.1
$region0: #{basic_block_forward.1}
  #allocation0 [shape = 'u32[]', space=smem, size = 0x4, offset = 0x4, fixed_abs, tag = 'smem constant byte address 0x4 - core index']
  #allocation1 [shape = 'u32[144,128]{1,0:T(1,128)}', space=vmem, size = 0x12000, scoped, tag = 'internal scratch']
  %s0 = inlined_call_operand.vmem [shape: bf16[32,64], index: 0, kind: input, shape index: {}]
  %s1 = inlined_call_operand.vmem [shape: bf16[3,64,128], index: 1, kind: input, shape index: {}]
  %s2 = inlined_call_operand.vmem [shape: bf16[3,128,128], index: 2, kind: input, shape index: {}]
  %s3 = inlined_call_operand.vmem [shape: bf16[64,128], index: 3, kind: input, shape index: {}]
  %s4 = inlined_call_operand.vmem [shape: f32[2,128], index: 4, kind: input, shape index: {}]
  %s5 = inlined_call_operand.vmem [shape: f32[32,128], index: 5, kind: output, shape index: {}]
  %s6 = sld [smem:[#allocation0]]
  $region30: #{basic_block_forward.1} parent=0
    _
  %s8 = ssub.s32 1, %s6
  %s9 = scalar_select 0, %s8, %s6
  // Predicated region
  $region2: #{basic_block_forward.1} parent=0 // pred_check
    _
  $region3: #{basic_block_forward.1} parent=0 // pred_check_branch
    %11 = sbr.rel (0) target = $region5
  $region4: #{basic_block_forward.1} parent=0 // pred_region
    _
  $region5: #{basic_block_forward.1} parent=0 // pred_fallthru
    _
  // Predicated region
  $region6: #{basic_block_forward.1} parent=0 // pred_check
    _
  $region7: #{basic_block_forward.1} parent=0 // pred_check_branch
    %13 = sbr.rel (0) target = $region9
  $region8: #{basic_block_forward.1} parent=0 // pred_region
    _
  $region9: #{basic_block_forward.1} parent=0 // pred_fallthru
    _
  // Predicated region
  $region10: #{basic_block_forward.1} parent=0 // pred_check
    _
  $region11: #{basic_block_forward.1} parent=0 // pred_check_branch
    %15 = sbr.rel (0) target = $region13
  $region12: #{basic_block_forward.1} parent=0 // pred_region
    _
  $region13: #{basic_block_forward.1} parent=0 // pred_fallthru
    _
  // Predicated region
  $region14: #{basic_block_forward.1} parent=0 // pred_check
    _
  $region15: #{basic_block_forward.1} parent=0 // pred_check_branch
    %17 = sbr.rel (0) target = $region17
  $region16: #{basic_block_forward.1} parent=0 // pred_region
    _
  $region17: #{basic_block_forward.1} parent=0 // pred_fallthru
    _
  // Predicated region
  $region18: #{basic_block_forward.1} parent=0 // pred_check
    _
  $region19: #{basic_block_forward.1} parent=0 // pred_check_branch
    %19 = sbr.rel (0) target = $region21
  $region20: #{basic_block_forward.1} parent=0 // pred_region
    _
  $region21: #{basic_block_forward.1} parent=0 // pred_fallthru
    _
  %v21 = vld [vmem:[%s0] sm:$0xf]
  %v22 = vld [vmem:[%s0 + $0x4] sm:$0xf]
  %v23 = vld [vmem:[%s0 + $0x8] sm:$0xf]
  %v24 = vld [vmem:[%s0 + $0xc] sm:$0xf]
  %v25 = vld [vmem:[%s4] sm:$0x3]
  %v26 = vlaneseq
  %v27 = vshrl.u32 %v26, 7
  %v28 = vadd.s32 %v27, 8
  %v29 = vadd.s32 %v27, 16
  %v30 = vadd.s32 %v27, 24
  %v31 = vlaneseq
  %v32 = vand.u32 %v31, 127
  %v33 = vsub.s32 %v27, 1
  %v34 = vsub.s32 %v28, 1
  %v35 = vsub.s32 %v29, 1
  %v36 = vsub.s32 %v30, 1
  %vm37 = vcmp.eq.s32.totalorder %v32, %v33
  %vm38 = vcmp.eq.s32.totalorder %v32, %v34
  %vm39 = vcmp.eq.s32.totalorder %v32, %v35
  %vm40 = vcmp.eq.s32.totalorder %v32, %v36
  %vm41 = vcmp.lt.s32.totalorder %v27, 0
  %v42 = vsub.s32 0, %v27
  %v43 = vsel %vm41, %v42, %v27
  %v44 = vshrl.u32 %v43, 4
  %v45 = vand.u32 %v43, 15
  %v46 = vsub.s32 0, %v45
  %v47 = vsel %vm41, %v46, %v45
  %vm48 = vcmp.lt.s32.totalorder %v28, 0
  %v49 = vsub.s32 0, %v28
  %v50 = vsel %vm48, %v49, %v28
  %v51 = vshrl.u32 %v50, 4
  %v52 = vand.u32 %v50, 15
  %v53 = vsub.s32 0, %v52
  %v54 = vsel %vm48, %v53, %v52
  %vm55 = vcmp.lt.s32.totalorder %v29, 0
  %v56 = vsub.s32 0, %v29
  %v57 = vsel %vm55, %v56, %v29
  %v58 = vshrl.u32 %v57, 4
  %v59 = vand.u32 %v57, 15
  %v60 = vsub.s32 0, %v59
  %v61 = vsel %vm55, %v60, %v59
  %vm62 = vcmp.lt.s32.totalorder %v30, 0
  %v63 = vsub.s32 0, %v30
  %v64 = vsel %vm62, %v63, %v30
  %v65 = vshrl.u32 %v64, 4
  %v66 = vand.u32 %v64, 15
  %v67 = vsub.s32 0, %v66
  %v68 = vsel %vm62, %v67, %v66
  %vm69 = vcmp.ne.s32.totalorder %v47, 0
  %vm70 = vcmp.ne.s32.totalorder %v54, 0
  %vm71 = vcmp.ne.s32.totalorder %v61, 0
  %vm72 = vcmp.ne.s32.totalorder %v68, 0
  %vm73 = vcmp.lt.s32.totalorder %v47, 0
  %vm74 = vcmp.lt.s32.totalorder %v54, 0
  %vm75 = vcmp.lt.s32.totalorder %v61, 0
  %vm76 = vcmp.lt.s32.totalorder %v68, 0
  %vm77 = vmand %vm73, %vm69
  %vm78 = vmand %vm74, %vm70
  %vm79 = vmand %vm75, %vm71
  %vm80 = vmand %vm76, %vm72
  %v81 = vadd.s32 %v47, 16
  %v82 = vadd.s32 %v54, 16
  %v83 = vadd.s32 %v61, 16
  %v84 = vadd.s32 %v68, 16
  %v85 = vsel %vm77, %v81, %v47
  %v86 = vsel %vm78, %v82, %v54
  %v87 = vsel %vm79, %v83, %v61
  %v88 = vsel %vm80, %v84, %v68
  %vm89 = vcmp.ne.s32.totalorder %v85, 0
  %vm90 = vcmp.ne.s32.totalorder %v86, 0
  %vm91 = vcmp.ne.s32.totalorder %v87, 0
  %vm92 = vcmp.ne.s32.totalorder %v88, 0
  %vm93 = vmand %vm37, %vm89
  %vm94 = vmand %vm38, %vm90
  %vm95 = vmand %vm39, %vm91
  %vm96 = vmand %vm40, %vm92
  %v97 = vsel %vm93, 1.0, 0.0
  %v98 = vsel %vm94, 1.0, 0.0
  %v99 = vsel %vm95, 1.0, 0.0
  %v100 = vsel %vm96, 1.0, 0.0
  %v101 = vadd.s32 %v27, 1
  %v102 = vadd.s32 %v28, 1
  %v103 = vadd.s32 %v29, 1
  %v104 = vadd.s32 %v30, 1
  %vm105 = vcmp.eq.s32.totalorder %v32, %v101
  %vm106 = vcmp.eq.s32.totalorder %v32, %v102
  %vm107 = vcmp.eq.s32.totalorder %v32, %v103
  %vm108 = vcmp.eq.s32.totalorder %v32, %v104
  %vm109 = vcmp.ne.s32.totalorder %v85, 15
  %vm110 = vcmp.ne.s32.totalorder %v86, 15
  %vm111 = vcmp.ne.s32.totalorder %v87, 15
  %vm112 = vcmp.ne.s32.totalorder %v88, 15
  %vm113 = vmand %vm105, %vm109
  %vm114 = vmand %vm106, %vm110
  %vm115 = vmand %vm107, %vm111
  %vm116 = vmand %vm108, %vm112
  %v117 = vsel %vm113, 1.0, 0.0
  %v118 = vsel %vm114, 1.0, 0.0
  %v119 = vsel %vm115, 1.0, 0.0
  %v120 = vsel %vm116, 1.0, 0.0
  %v121 = vld [vmem:[%s1] sm:$0xf]
  %v122 = vld [vmem:[%s1 + $0x4] sm:$0xf]
  %v123 = vld [vmem:[%s1 + $0x8] sm:$0xf]
  %v124 = vld [vmem:[%s1 + $0xc] sm:$0xf]
  %v125 = vld [vmem:[%s1 + $0x10] sm:$0xf]
  %v126 = vld [vmem:[%s1 + $0x14] sm:$0xf]
  %v127 = vld [vmem:[%s1 + $0x18] sm:$0xf]
  %v128 = vld [vmem:[%s1 + $0x1c] sm:$0xf]
  %v133 = vunpack.c.l.b16 %v21
  %v134 = vunpack.c.l.b16 %v22
  %v135 = vunpack.c.l.b16 %v23
  %v136 = vunpack.c.l.b16 %v24
  %v137 = vpack.c.b16 %v134, %v133
  %v138 = vpack.c.b16 %v136, %v135
  %v147 = vunpack.c.l.b16 %v121
  %v148 = vunpack.c.l.b16 %v122
  %v149 = vunpack.c.l.b16 %v123
  %v150 = vunpack.c.l.b16 %v124
  %v151 = vunpack.c.l.b16 %v125
  %v152 = vunpack.c.l.b16 %v126
  %v153 = vunpack.c.l.b16 %v127
  %v154 = vunpack.c.l.b16 %v128
  %v155 = vpack.c.b16 %v148, %v147
  %v156 = vpack.c.b16 %v150, %v149
  %v157 = vpack.c.b16 %v152, %v151
  %v158 = vpack.c.b16 %v154, %v153
  %vm163 = vcmask 523264
  %v165 = vsel %vm163, %v137, 0
  %v168 = vsel %vm163, %v138, 0
  %170 = vmatprep.subr.bf16.mxu0 0
  %171 = vmatpush1.bf16.msra.mxu0 0
  %172 = vmatprep.subr.bf16.mxu0 0
  %173 = vmatpush1.bf16.msra.mxu0 0
  %174 = vmatprep.subr.bf16.mxu0 0
  %175 = vmatpush1.bf16.msra.mxu0 0
  %176 = vmatprep.subr.bf16.mxu0 0
  %177 = vmatpush1.bf16.msra.mxu0 0
  %178 = vmatprep.subr.bf16.mxu0 0
  %179 = vmatpush1.bf16.msra.mxu0 %v158
  %180 = vmatprep.subr.bf16.mxu0 0
  %181 = vmatpush1.bf16.msra.mxu0 %v157
  %182 = vmatprep.subr.bf16.mxu0 0
  %183 = vmatpush1.bf16.msra.mxu0 %v156
  %184 = vmatprep.subr.bf16.mxu0 0
  %185 = vmatpush1.bf16.msra.mxu0 %v155
  %186 = vmatprep.subr.bf16.mxu0 0
  %187 = vmatpush2.bf16.msra.mxu0 0
  %188 = vmatprep.subr.bf16.mxu0 0
  %189 = vmatpush2.bf16.msra.mxu0 0
  %190 = vmatprep.subr.bf16.mxu0 0
  %191 = vmatpush2.bf16.msra.mxu0 0
  %192 = vmatprep.subr.bf16.mxu0 0
  %193 = vmatpush2.bf16.msra.mxu0 0
  %194 = vmatprep.subr.bf16.mxu0 0
  %195 = vmatpush2.bf16.msra.mxu0 0
  %196 = vmatprep.subr.bf16.mxu0 0
  %197 = vmatpush2.bf16.msra.mxu0 0
  %198 = vmatprep.subr.bf16.mxu0 0
  %199 = vmatpush2.bf16.msra.mxu0 0
  %200 = vmatprep.subr.bf16.mxu0 0
  %201 = vmatpush2.bf16.msra.mxu0 0
  %202 = vmatprep.mubr.bf16.mxu0 0
  %203 = vmatmul.mubr.bf16.gmra.mxu0 %v165
  %v204 = vpop.f32.mrf.mxu0
  %v205 = vadd.f32 0.0, %v204
  %v206 = vpop.f32.mrf.mxu0
  %v207 = vpop.f32.mrf.mxu0
  %v208 = vadd.f32 0.0, %v207
  %v209 = vpop.f32.mrf.mxu0
  %210 = vmatprep.mubr.bf16.mxu0 0
  %211 = vmatmul.mubr.bf16.gmra.mxu0 %v168
  %v212 = vpop.f32.mrf.mxu0
  %v213 = vadd.f32 0.0, %v212
  %v214 = vpop.f32.mrf.mxu0
  %v215 = vpop.f32.mrf.mxu0
  %v216 = vadd.f32 0.0, %v215
  %v217 = vpop.f32.mrf.mxu0
  %218 = vdwg.mxu0
  %s219 = scalar_lea.vmem %s1, 32
  %v220 = vld [vmem:[%s219] sm:$0xf]
  %v221 = vld [vmem:[%s219 + $0x4] sm:$0xf]
  %v222 = vld [vmem:[%s219 + $0x8] sm:$0xf]
  %v223 = vld [vmem:[%s219 + $0xc] sm:$0xf]
  %v224 = vld [vmem:[%s219 + $0x10] sm:$0xf]
  %v225 = vld [vmem:[%s219 + $0x14] sm:$0xf]
  %v226 = vld [vmem:[%s219 + $0x18] sm:$0xf]
  %v227 = vld [vmem:[%s219 + $0x1c] sm:$0xf]
  %s228 = scalar_lea.vmem %s1, 64
  %v229 = vld [vmem:[%s228] sm:$0xf]
  %v230 = vld [vmem:[%s228 + $0x4] sm:$0xf]
  %v231 = vld [vmem:[%s228 + $0x8] sm:$0xf]
  %v232 = vld [vmem:[%s228 + $0xc] sm:$0xf]
  %v233 = vld [vmem:[%s228 + $0x10] sm:$0xf]
  %v234 = vld [vmem:[%s228 + $0x14] sm:$0xf]
  %v235 = vld [vmem:[%s228 + $0x18] sm:$0xf]
  %v236 = vld [vmem:[%s228 + $0x1c] sm:$0xf]
  %v245 = vunpack.c.l.b16 %v229
  %v246 = vunpack.c.l.b16 %v230
  %v247 = vunpack.c.l.b16 %v231
  %v248 = vunpack.c.l.b16 %v232
  %v249 = vunpack.c.l.b16 %v233
  %v250 = vunpack.c.l.b16 %v234
  %v251 = vunpack.c.l.b16 %v235
  %v252 = vunpack.c.l.b16 %v236
  %v253 = vpack.c.b16 %v246, %v245
  %v254 = vpack.c.b16 %v248, %v247
  %v255 = vpack.c.b16 %v250, %v249
  %v256 = vpack.c.b16 %v252, %v251
  %261 = vmatprep.subr.bf16.mxu0 0
  %262 = vmatpush1.bf16.msra.mxu0 0
  %263 = vmatprep.subr.bf16.mxu0 0
  %264 = vmatpush1.bf16.msra.mxu0 0
  %265 = vmatprep.subr.bf16.mxu0 0
  %266 = vmatpush1.bf16.msra.mxu0 0
  %267 = vmatprep.subr.bf16.mxu0 0
  %268 = vmatpush1.bf16.msra.mxu0 0
  %269 = vmatprep.subr.bf16.mxu0 0
  %270 = vmatpush1.bf16.msra.mxu0 %v256
  %271 = vmatprep.subr.bf16.mxu0 0
  %272 = vmatpush1.bf16.msra.mxu0 %v255
  %273 = vmatprep.subr.bf16.mxu0 0
  %274 = vmatpush1.bf16.msra.mxu0 %v254
  %275 = vmatprep.subr.bf16.mxu0 0
  %276 = vmatpush1.bf16.msra.mxu0 %v253
  %277 = vmatprep.subr.bf16.mxu0 0
  %278 = vmatpush2.bf16.msra.mxu0 0
  %279 = vmatprep.subr.bf16.mxu0 0
  %280 = vmatpush2.bf16.msra.mxu0 0
  %281 = vmatprep.subr.bf16.mxu0 0
  %282 = vmatpush2.bf16.msra.mxu0 0
  %283 = vmatprep.subr.bf16.mxu0 0
  %284 = vmatpush2.bf16.msra.mxu0 0
  %285 = vmatprep.subr.bf16.mxu0 0
  %286 = vmatpush2.bf16.msra.mxu0 0
  %287 = vmatprep.subr.bf16.mxu0 0
  %288 = vmatpush2.bf16.msra.mxu0 0
  %289 = vmatprep.subr.bf16.mxu0 0
  %290 = vmatpush2.bf16.msra.mxu0 0
  %291 = vmatprep.subr.bf16.mxu0 0
  %292 = vmatpush2.bf16.msra.mxu0 0
  %293 = vmatprep.mubr.bf16.mxu0 0
  %294 = vmatmul.mubr.bf16.gmra.mxu0 %v165
  %v295 = vpop.f32.mrf.mxu0
  %v296 = vadd.f32 0.0, %v295
  %v297 = vpop.f32.mrf.mxu0
  %v298 = vpop.f32.mrf.mxu0
  %v299 = vadd.f32 0.0, %v298
  %v300 = vpop.f32.mrf.mxu0
  %301 = vmatprep.mubr.bf16.mxu0 0
  %302 = vmatmul.mubr.bf16.gmra.mxu0 %v168
  %v303 = vpop.f32.mrf.mxu0
  %v304 = vadd.f32 0.0, %v303
  %v305 = vpop.f32.mrf.mxu0
  %v306 = vpop.f32.mrf.mxu0
  %v307 = vadd.f32 0.0, %v306
  %v308 = vpop.f32.mrf.mxu0
  %309 = vdwg.mxu0
  %vm310 = vcmask 261120
  %v312 = vsel %vm310, %v97, 0
  %v315 = vsel %vm310, %v98, 0
  %v318 = vsel %vm310, %v99, 0
  %v321 = vsel %vm310, %v100, 0
  %323 = vmatprep.subr.mxu0 0.0
  %324 = vmatpush1.msra.mxu0 0.0
  %325 = vmatprep.subr.mxu0 0.0
  %326 = vmatpush1.msra.mxu0 0.0
  %327 = vmatprep.subr.mxu0 0.0
  %328 = vmatpush1.msra.mxu0 0.0
  %329 = vmatprep.subr.mxu0 0.0
  %330 = vmatpush1.msra.mxu0 0.0
  %331 = vmatprep.subr.mxu0 0.0
  %332 = vmatpush1.msra.mxu0 0.0
  %333 = vmatprep.subr.mxu0 0.0
  %334 = vmatpush1.msra.mxu0 0.0
  %335 = vmatprep.subr.mxu0 0.0
  %336 = vmatpush1.msra.mxu0 0.0
  %337 = vmatprep.subr.mxu0 0.0
  %338 = vmatpush1.msra.mxu0 0.0
  %339 = vmatprep.subr.mxu0 0.0
  %340 = vmatpush1.msra.mxu0 0.0
  %341 = vmatprep.subr.mxu0 0.0
  %342 = vmatpush1.msra.mxu0 0.0
  %343 = vmatprep.subr.mxu0 0.0
  %344 = vmatpush1.msra.mxu0 0.0
  %345 = vmatprep.subr.mxu0 0.0
  %346 = vmatpush1.msra.mxu0 0.0
  %347 = vmatprep.subr.mxu0 0.0
  %348 = vmatpush1.msra.mxu0 %v216
  %349 = vmatprep.subr.mxu0 0.0
  %350 = vmatpush1.msra.mxu0 %v213
  %351 = vmatprep.subr.mxu0 0.0
  %352 = vmatpush1.msra.mxu0 %v208
  %353 = vmatprep.subr.mxu0 0.0
  %354 = vmatpush1.msra.mxu0 %v205
  %355 = vmatprep.subr.mxu0 0.0
  %356 = vmatpush2.msra.mxu0 0.0
  %357 = vmatprep.subr.mxu0 0.0
  %358 = vmatpush2.msra.mxu0 0.0
  %359 = vmatprep.subr.mxu0 0.0
  %360 = vmatpush2.msra.mxu0 0.0
  %361 = vmatprep.subr.mxu0 0.0
  %362 = vmatpush2.msra.mxu0 0.0
  %363 = vmatprep.subr.mxu0 0.0
  %364 = vmatpush2.msra.mxu0 0.0
  %365 = vmatprep.subr.mxu0 0.0
  %366 = vmatpush2.msra.mxu0 0.0
  %367 = vmatprep.subr.mxu0 0.0
  %368 = vmatpush2.msra.mxu0 0.0
  %369 = vmatprep.subr.mxu0 0.0
  %370 = vmatpush2.msra.mxu0 0.0
  %371 = vmatprep.subr.mxu0 0.0
  %372 = vmatpush2.msra.mxu0 0.0
  %373 = vmatprep.subr.mxu0 0.0
  %374 = vmatpush2.msra.mxu0 0.0
  %375 = vmatprep.subr.mxu0 0.0
  %376 = vmatpush2.msra.mxu0 0.0
  %377 = vmatprep.subr.mxu0 0.0
  %378 = vmatpush2.msra.mxu0 0.0
  %379 = vmatprep.subr.mxu0 0.0
  %380 = vmatpush2.msra.mxu0 0.0
  %381 = vmatprep.subr.mxu0 0.0
  %382 = vmatpush2.msra.mxu0 0.0
  %383 = vmatprep.subr.mxu0 0.0
  %384 = vmatpush2.msra.mxu0 0.0
  %385 = vmatprep.subr.mxu0 0.0
  %386 = vmatpush2.msra.mxu0 0.0
  %387 = vmatprep.mubr.f32.mxu0 0.0
  %388 = vmatmul.mubr.f32.gmra.mxu0 %v312
  %v389 = vpop.f32.mrf.mxu0
  %v390 = vadd.f32 0.0, %v389
  %v391 = vpop.f32.mrf.mxu0
  %392 = vmatprep.mubr.f32.mxu0 0.0
  %393 = vmatmul.mubr.f32.gmra.mxu0 %v315
  %v394 = vpop.f32.mrf.mxu0
  %v395 = vadd.f32 0.0, %v394
  %v396 = vpop.f32.mrf.mxu0
  %397 = vmatprep.mubr.f32.mxu0 0.0
  %398 = vmatmul.mubr.f32.gmra.mxu0 %v318
  %v399 = vpop.f32.mrf.mxu0
  %v400 = vadd.f32 0.0, %v399
  %v401 = vpop.f32.mrf.mxu0
  %402 = vmatprep.mubr.f32.mxu0 0.0
  %403 = vmatmul.mubr.f32.gmra.mxu0 %v321
  %v404 = vpop.f32.mrf.mxu0
  %v405 = vadd.f32 0.0, %v404
  %v406 = vpop.f32.mrf.mxu0
  %407 = vdwg.mxu0
  %v416 = vunpack.c.l.b16 %v220
  %v417 = vunpack.c.l.b16 %v221
  %v418 = vunpack.c.l.b16 %v222
  %v419 = vunpack.c.l.b16 %v223
  %v420 = vunpack.c.l.b16 %v224
  %v421 = vunpack.c.l.b16 %v225
  %v422 = vunpack.c.l.b16 %v226
  %v423 = vunpack.c.l.b16 %v227
  %v424 = vpack.c.b16 %v417, %v416
  %v425 = vpack.c.b16 %v419, %v418
  %v426 = vpack.c.b16 %v421, %v420
  %v427 = vpack.c.b16 %v423, %v422
  %432 = vmatprep.subr.bf16.mxu0 0
  %433 = vmatpush1.bf16.msra.mxu0 0
  %434 = vmatprep.subr.bf16.mxu0 0
  %435 = vmatpush1.bf16.msra.mxu0 0
  %436 = vmatprep.subr.bf16.mxu0 0
  %437 = vmatpush1.bf16.msra.mxu0 0
  %438 = vmatprep.subr.bf16.mxu0 0
  %439 = vmatpush1.bf16.msra.mxu0 0
  %440 = vmatprep.subr.bf16.mxu0 0
  %441 = vmatpush1.bf16.msra.mxu0 %v427
  %442 = vmatprep.subr.bf16.mxu0 0
  %443 = vmatpush1.bf16.msra.mxu0 %v426
  %444 = vmatprep.subr.bf16.mxu0 0
  %445 = vmatpush1.bf16.msra.mxu0 %v425
  %446 = vmatprep.subr.bf16.mxu0 0
  %447 = vmatpush1.bf16.msra.mxu0 %v424
  %448 = vmatprep.subr.bf16.mxu0 0
  %449 = vmatpush2.bf16.msra.mxu0 0
  %450 = vmatprep.subr.bf16.mxu0 0
  %451 = vmatpush2.bf16.msra.mxu0 0
  %452 = vmatprep.subr.bf16.mxu0 0
  %453 = vmatpush2.bf16.msra.mxu0 0
  %454 = vmatprep.subr.bf16.mxu0 0
  %455 = vmatpush2.bf16.msra.mxu0 0
  %456 = vmatprep.subr.bf16.mxu0 0
  %457 = vmatpush2.bf16.msra.mxu0 0
  %458 = vmatprep.subr.bf16.mxu0 0
  %459 = vmatpush2.bf16.msra.mxu0 0
  %460 = vmatprep.subr.bf16.mxu0 0
  %461 = vmatpush2.bf16.msra.mxu0 0
  %462 = vmatprep.subr.bf16.mxu0 0
  %463 = vmatpush2.bf16.msra.mxu0 0
  %464 = vmatprep.mubr.bf16.mxu0 0
  %465 = vmatmul.mubr.bf16.gmra.mxu0 %v165
  %v466 = vpop.f32.mrf.mxu0
  %v467 = vadd.f32 %v390, %v466
  %v468 = vpop.f32.mrf.mxu0
  %v469 = vpop.f32.mrf.mxu0
  %v470 = vadd.f32 %v395, %v469
  %v471 = vpop.f32.mrf.mxu0
  %472 = vmatprep.mubr.bf16.mxu0 0
  %473 = vmatmul.mubr.bf16.gmra.mxu0 %v168
  %v474 = vpop.f32.mrf.mxu0
  %v475 = vadd.f32 %v400, %v474
  %v476 = vpop.f32.mrf.mxu0
  %v477 = vpop.f32.mrf.mxu0
  %v478 = vadd.f32 %v405, %v477
  %v479 = vpop.f32.mrf.mxu0
  %480 = vdwg.mxu0
  %v482 = vsel %vm310, %v117, 0
  %v485 = vsel %vm310, %v118, 0
  %v488 = vsel %vm310, %v119, 0
  %v491 = vsel %vm310, %v120, 0
  %493 = vmatprep.subr.mxu0 0.0
  %494 = vmatpush1.msra.mxu0 0.0
  %495 = vmatprep.subr.mxu0 0.0
  %496 = vmatpush1.msra.mxu0 0.0
  %497 = vmatprep.subr.mxu0 0.0
  %498 = vmatpush1.msra.mxu0 0.0
  %499 = vmatprep.subr.mxu0 0.0
  %500 = vmatpush1.msra.mxu0 0.0
  %501 = vmatprep.subr.mxu0 0.0
  %502 = vmatpush1.msra.mxu0 0.0
  %503 = vmatprep.subr.mxu0 0.0
  %504 = vmatpush1.msra.mxu0 0.0
  %505 = vmatprep.subr.mxu0 0.0
  %506 = vmatpush1.msra.mxu0 0.0
  %507 = vmatprep.subr.mxu0 0.0
  %508 = vmatpush1.msra.mxu0 0.0
  %509 = vmatprep.subr.mxu0 0.0
  %510 = vmatpush1.msra.mxu0 0.0
  %511 = vmatprep.subr.mxu0 0.0
  %512 = vmatpush1.msra.mxu0 0.0
  %513 = vmatprep.subr.mxu0 0.0
  %514 = vmatpush1.msra.mxu0 0.0
  %515 = vmatprep.subr.mxu0 0.0
  %516 = vmatpush1.msra.mxu0 0.0
  %517 = vmatprep.subr.mxu0 0.0
  %518 = vmatpush1.msra.mxu0 %v307
  %519 = vmatprep.subr.mxu0 0.0
  %520 = vmatpush1.msra.mxu0 %v304
  %521 = vmatprep.subr.mxu0 0.0
  %522 = vmatpush1.msra.mxu0 %v299
  %523 = vmatprep.subr.mxu0 0.0
  %524 = vmatpush1.msra.mxu0 %v296
  %525 = vmatprep.subr.mxu0 0.0
  %526 = vmatpush2.msra.mxu0 0.0
  %527 = vmatprep.subr.mxu0 0.0
  %528 = vmatpush2.msra.mxu0 0.0
  %529 = vmatprep.subr.mxu0 0.0
  %530 = vmatpush2.msra.mxu0 0.0
  %531 = vmatprep.subr.mxu0 0.0
  %532 = vmatpush2.msra.mxu0 0.0
  %533 = vmatprep.subr.mxu0 0.0
  %534 = vmatpush2.msra.mxu0 0.0
  %535 = vmatprep.subr.mxu0 0.0
  %536 = vmatpush2.msra.mxu0 0.0
  %537 = vmatprep.subr.mxu0 0.0
  %538 = vmatpush2.msra.mxu0 0.0
  %539 = vmatprep.subr.mxu0 0.0
  %540 = vmatpush2.msra.mxu0 0.0
  %541 = vmatprep.subr.mxu0 0.0
  %542 = vmatpush2.msra.mxu0 0.0
  %543 = vmatprep.subr.mxu0 0.0
  %544 = vmatpush2.msra.mxu0 0.0
  %545 = vmatprep.subr.mxu0 0.0
  %546 = vmatpush2.msra.mxu0 0.0
  %547 = vmatprep.subr.mxu0 0.0
  %548 = vmatpush2.msra.mxu0 0.0
  %549 = vmatprep.subr.mxu0 0.0
  %550 = vmatpush2.msra.mxu0 0.0
  %551 = vmatprep.subr.mxu0 0.0
  %552 = vmatpush2.msra.mxu0 0.0
  %553 = vmatprep.subr.mxu0 0.0
  %554 = vmatpush2.msra.mxu0 0.0
  %555 = vmatprep.subr.mxu0 0.0
  %556 = vmatpush2.msra.mxu0 0.0
  %557 = vmatprep.mubr.f32.mxu0 0.0
  %558 = vmatmul.mubr.f32.gmra.mxu0 %v482
  %v559 = vpop.f32.mrf.mxu0
  %v560 = vadd.f32 0.0, %v559
  %v561 = vpop.f32.mrf.mxu0
  %562 = vmatprep.mubr.f32.mxu0 0.0
  %563 = vmatmul.mubr.f32.gmra.mxu0 %v485
  %v564 = vpop.f32.mrf.mxu0
  %v565 = vadd.f32 0.0, %v564
  %v566 = vpop.f32.mrf.mxu0
  %567 = vmatprep.mubr.f32.mxu0 0.0
  %568 = vmatmul.mubr.f32.gmra.mxu0 %v488
  %v569 = vpop.f32.mrf.mxu0
  %v570 = vadd.f32 0.0, %v569
  %v571 = vpop.f32.mrf.mxu0
  %572 = vmatprep.mubr.f32.mxu0 0.0
  %573 = vmatmul.mubr.f32.gmra.mxu0 %v491
  %v574 = vpop.f32.mrf.mxu0
  %v575 = vadd.f32 0.0, %v574
  %v576 = vpop.f32.mrf.mxu0
  %577 = vdwg.mxu0
  %v578 = vadd.f32 %v467, %v560
  %v579 = vadd.f32 %v470, %v565
  %v580 = vadd.f32 %v475, %v570
  %v581 = vadd.f32 %v478, %v575
  %v582 = vlaneseq
  %v583 = vshrl.u32 %v582, 7
  %v584 = vsub.s32 0, %v583
  %v585 = vrot.slane %v25, %v584
  %v586 = vadd.f32 %v578, %v585
  %v587 = vadd.f32 %v579, %v585
  %v588 = vadd.f32 %v580, %v585
  %v589 = vadd.f32 %v581, %v585
  %v590 = vmax.f32 %v586, 0.0
  %v591 = vmax.f32 %v587, 0.0
  %v592 = vmax.f32 %v588, 0.0
  %v593 = vmax.f32 %v589, 0.0
  %v594 = vpack.c.bf16 %v591, %v590
  %v595 = vpack.c.bf16 %v593, %v592
  %v596 = vld [vmem:[%s2] sm:$0xf]
  %v597 = vld [vmem:[%s2 + $0x4] sm:$0xf]
  %v598 = vld [vmem:[%s2 + $0x8] sm:$0xf]
  %v599 = vld [vmem:[%s2 + $0xc] sm:$0xf]
  %v600 = vld [vmem:[%s2 + $0x10] sm:$0xf]
  %v601 = vld [vmem:[%s2 + $0x14] sm:$0xf]
  %v602 = vld [vmem:[%s2 + $0x18] sm:$0xf]
  %v603 = vld [vmem:[%s2 + $0x1c] sm:$0xf]
  %v604 = vld [vmem:[%s2 + $0x20] sm:$0xf]
  %v605 = vld [vmem:[%s2 + $0x24] sm:$0xf]
  %v606 = vld [vmem:[%s2 + $0x28] sm:$0xf]
  %v607 = vld [vmem:[%s2 + $0x2c] sm:$0xf]
  %v608 = vld [vmem:[%s2 + $0x30] sm:$0xf]
  %v609 = vld [vmem:[%s2 + $0x34] sm:$0xf]
  %v610 = vld [vmem:[%s2 + $0x38] sm:$0xf]
  %v611 = vld [vmem:[%s2 + $0x3c] sm:$0xf]
  %v628 = vunpack.c.l.b16 %v596
  %v629 = vunpack.c.l.b16 %v597
  %v630 = vunpack.c.l.b16 %v598
  %v631 = vunpack.c.l.b16 %v599
  %v632 = vunpack.c.l.b16 %v600
  %v633 = vunpack.c.l.b16 %v601
  %v634 = vunpack.c.l.b16 %v602
  %v635 = vunpack.c.l.b16 %v603
  %v636 = vunpack.c.l.b16 %v604
  %v637 = vunpack.c.l.b16 %v605
  %v638 = vunpack.c.l.b16 %v606
  %v639 = vunpack.c.l.b16 %v607
  %v640 = vunpack.c.l.b16 %v608
  %v641 = vunpack.c.l.b16 %v609
  %v642 = vunpack.c.l.b16 %v610
  %v643 = vunpack.c.l.b16 %v611
  %v644 = vpack.c.b16 %v629, %v628
  %v645 = vpack.c.b16 %v631, %v630
  %v646 = vpack.c.b16 %v633, %v632
  %v647 = vpack.c.b16 %v635, %v634
  %v648 = vpack.c.b16 %v637, %v636
  %v649 = vpack.c.b16 %v639, %v638
  %v650 = vpack.c.b16 %v641, %v640
  %v651 = vpack.c.b16 %v643, %v642
  %660 = vmatprep.subr.bf16.mxu0 0
  %661 = vmatpush1.bf16.msra.mxu0 %v651
  %662 = vmatprep.subr.bf16.mxu0 0
  %663 = vmatpush1.bf16.msra.mxu0 %v650
  %664 = vmatprep.subr.bf16.mxu0 0
  %665 = vmatpush1.bf16.msra.mxu0 %v649
  %666 = vmatprep.subr.bf16.mxu0 0
  %667 = vmatpush1.bf16.msra.mxu0 %v648
  %668 = vmatprep.subr.bf16.mxu0 0
  %669 = vmatpush1.bf16.msra.mxu0 %v647
  %670 = vmatprep.subr.bf16.mxu0 0
  %671 = vmatpush1.bf16.msra.mxu0 %v646
  %672 = vmatprep.subr.bf16.mxu0 0
  %673 = vmatpush1.bf16.msra.mxu0 %v645
  %674 = vmatprep.subr.bf16.mxu0 0
  %675 = vmatpush1.bf16.msra.mxu0 %v644
  %676 = vmatprep.subr.bf16.mxu0 0
  %677 = vmatpush2.bf16.msra.mxu0 0
  %678 = vmatprep.subr.bf16.mxu0 0
  %679 = vmatpush2.bf16.msra.mxu0 0
  %680 = vmatprep.subr.bf16.mxu0 0
  %681 = vmatpush2.bf16.msra.mxu0 0
  %682 = vmatprep.subr.bf16.mxu0 0
  %683 = vmatpush2.bf16.msra.mxu0 0
  %684 = vmatprep.subr.bf16.mxu0 0
  %685 = vmatpush2.bf16.msra.mxu0 0
  %686 = vmatprep.subr.bf16.mxu0 0
  %687 = vmatpush2.bf16.msra.mxu0 0
  %688 = vmatprep.subr.bf16.mxu0 0
  %689 = vmatpush2.bf16.msra.mxu0 0
  %690 = vmatprep.subr.bf16.mxu0 0
  %691 = vmatpush2.bf16.msra.mxu0 0
  %692 = vmatprep.mubr.bf16.mxu0 0
  %693 = vmatmul.mubr.bf16.gmra.mxu0 %v594
  %v694 = vpop.f32.mrf.mxu0
  %v695 = vadd.f32 0.0, %v694
  %v696 = vpop.f32.mrf.mxu0
  %v697 = vpop.f32.mrf.mxu0
  %v698 = vadd.f32 0.0, %v697
  %v699 = vpop.f32.mrf.mxu0
  %700 = vmatprep.mubr.bf16.mxu0 0
  %701 = vmatmul.mubr.bf16.gmra.mxu0 %v595
  %v702 = vpop.f32.mrf.mxu0
  %v703 = vadd.f32 0.0, %v702
  %v704 = vpop.f32.mrf.mxu0
  %v705 = vpop.f32.mrf.mxu0
  %v706 = vadd.f32 0.0, %v705
  %v707 = vpop.f32.mrf.mxu0
  %708 = vdwg.mxu0
  %s709 = scalar_lea.vmem %s2, 64
  %v710 = vld [vmem:[%s709] sm:$0xf]
  %v711 = vld [vmem:[%s709 + $0x4] sm:$0xf]
  %v712 = vld [vmem:[%s709 + $0x8] sm:$0xf]
  %v713 = vld [vmem:[%s709 + $0xc] sm:$0xf]
  %v714 = vld [vmem:[%s709 + $0x10] sm:$0xf]
  %v715 = vld [vmem:[%s709 + $0x14] sm:$0xf]
  %v716 = vld [vmem:[%s709 + $0x18] sm:$0xf]
  %v717 = vld [vmem:[%s709 + $0x1c] sm:$0xf]
  %v718 = vld [vmem:[%s709 + $0x20] sm:$0xf]
  %v719 = vld [vmem:[%s709 + $0x24] sm:$0xf]
  %v720 = vld [vmem:[%s709 + $0x28] sm:$0xf]
  %v721 = vld [vmem:[%s709 + $0x2c] sm:$0xf]
  %v722 = vld [vmem:[%s709 + $0x30] sm:$0xf]
  %v723 = vld [vmem:[%s709 + $0x34] sm:$0xf]
  %v724 = vld [vmem:[%s709 + $0x38] sm:$0xf]
  %v725 = vld [vmem:[%s709 + $0x3c] sm:$0xf]
  %s726 = scalar_lea.vmem %s2, 128
  %v727 = vld [vmem:[%s726] sm:$0xf]
  %v728 = vld [vmem:[%s726 + $0x4] sm:$0xf]
  %v729 = vld [vmem:[%s726 + $0x8] sm:$0xf]
  %v730 = vld [vmem:[%s726 + $0xc] sm:$0xf]
  %v731 = vld [vmem:[%s726 + $0x10] sm:$0xf]
  %v732 = vld [vmem:[%s726 + $0x14] sm:$0xf]
  %v733 = vld [vmem:[%s726 + $0x18] sm:$0xf]
  %v734 = vld [vmem:[%s726 + $0x1c] sm:$0xf]
  %v735 = vld [vmem:[%s726 + $0x20] sm:$0xf]
  %v736 = vld [vmem:[%s726 + $0x24] sm:$0xf]
  %v737 = vld [vmem:[%s726 + $0x28] sm:$0xf]
  %v738 = vld [vmem:[%s726 + $0x2c] sm:$0xf]
  %v739 = vld [vmem:[%s726 + $0x30] sm:$0xf]
  %v740 = vld [vmem:[%s726 + $0x34] sm:$0xf]
  %v741 = vld [vmem:[%s726 + $0x38] sm:$0xf]
  %v742 = vld [vmem:[%s726 + $0x3c] sm:$0xf]
  %v759 = vunpack.c.l.b16 %v727
  %v760 = vunpack.c.l.b16 %v728
  %v761 = vunpack.c.l.b16 %v729
  %v762 = vunpack.c.l.b16 %v730
  %v763 = vunpack.c.l.b16 %v731
  %v764 = vunpack.c.l.b16 %v732
  %v765 = vunpack.c.l.b16 %v733
  %v766 = vunpack.c.l.b16 %v734
  %v767 = vunpack.c.l.b16 %v735
  %v768 = vunpack.c.l.b16 %v736
  %v769 = vunpack.c.l.b16 %v737
  %v770 = vunpack.c.l.b16 %v738
  %v771 = vunpack.c.l.b16 %v739
  %v772 = vunpack.c.l.b16 %v740
  %v773 = vunpack.c.l.b16 %v741
  %v774 = vunpack.c.l.b16 %v742
  %v775 = vpack.c.b16 %v760, %v759
  %v776 = vpack.c.b16 %v762, %v761
  %v777 = vpack.c.b16 %v764, %v763
  %v778 = vpack.c.b16 %v766, %v765
  %v779 = vpack.c.b16 %v768, %v767
  %v780 = vpack.c.b16 %v770, %v769
  %v781 = vpack.c.b16 %v772, %v771
  %v782 = vpack.c.b16 %v774, %v773
  %791 = vmatprep.subr.bf16.mxu0 0
  %792 = vmatpush1.bf16.msra.mxu0 %v782
  %793 = vmatprep.subr.bf16.mxu0 0
  %794 = vmatpush1.bf16.msra.mxu0 %v781
  %795 = vmatprep.subr.bf16.mxu0 0
  %796 = vmatpush1.bf16.msra.mxu0 %v780
  %797 = vmatprep.subr.bf16.mxu0 0
  %798 = vmatpush1.bf16.msra.mxu0 %v779
  %799 = vmatprep.subr.bf16.mxu0 0
  %800 = vmatpush1.bf16.msra.mxu0 %v778
  %801 = vmatprep.subr.bf16.mxu0 0
  %802 = vmatpush1.bf16.msra.mxu0 %v777
  %803 = vmatprep.subr.bf16.mxu0 0
  %804 = vmatpush1.bf16.msra.mxu0 %v776
  %805 = vmatprep.subr.bf16.mxu0 0
  %806 = vmatpush1.bf16.msra.mxu0 %v775
  %807 = vmatprep.subr.bf16.mxu0 0
  %808 = vmatpush2.bf16.msra.mxu0 0
  %809 = vmatprep.subr.bf16.mxu0 0
  %810 = vmatpush2.bf16.msra.mxu0 0
  %811 = vmatprep.subr.bf16.mxu0 0
  %812 = vmatpush2.bf16.msra.mxu0 0
  %813 = vmatprep.subr.bf16.mxu0 0
  %814 = vmatpush2.bf16.msra.mxu0 0
  %815 = vmatprep.subr.bf16.mxu0 0
  %816 = vmatpush2.bf16.msra.mxu0 0
  %817 = vmatprep.subr.bf16.mxu0 0
  %818 = vmatpush2.bf16.msra.mxu0 0
  %819 = vmatprep.subr.bf16.mxu0 0
  %820 = vmatpush2.bf16.msra.mxu0 0
  %821 = vmatprep.subr.bf16.mxu0 0
  %822 = vmatpush2.bf16.msra.mxu0 0
  %823 = vmatprep.mubr.bf16.mxu0 0
  %824 = vmatmul.mubr.bf16.gmra.mxu0 %v594
  %v825 = vpop.f32.mrf.mxu0
  %v826 = vadd.f32 0.0, %v825
  %v827 = vpop.f32.mrf.mxu0
  %v828 = vpop.f32.mrf.mxu0
  %v829 = vadd.f32 0.0, %v828
  %v830 = vpop.f32.mrf.mxu0
  %831 = vmatprep.mubr.bf16.mxu0 0
  %832 = vmatmul.mubr.bf16.gmra.mxu0 %v595
  %v833 = vpop.f32.mrf.mxu0
  %v834 = vadd.f32 0.0, %v833
  %v835 = vpop.f32.mrf.mxu0
  %v836 = vpop.f32.mrf.mxu0
  %v837 = vadd.f32 0.0, %v836
  %v838 = vpop.f32.mrf.mxu0
  %839 = vdwg.mxu0
  %840 = vmatprep.subr.mxu0 0.0
  %841 = vmatpush1.msra.mxu0 0.0
  %842 = vmatprep.subr.mxu0 0.0
  %843 = vmatpush1.msra.mxu0 0.0
  %844 = vmatprep.subr.mxu0 0.0
  %845 = vmatpush1.msra.mxu0 0.0
  %846 = vmatprep.subr.mxu0 0.0
  %847 = vmatpush1.msra.mxu0 0.0
  %848 = vmatprep.subr.mxu0 0.0
  %849 = vmatpush1.msra.mxu0 0.0
  %850 = vmatprep.subr.mxu0 0.0
  %851 = vmatpush1.msra.mxu0 0.0
  %852 = vmatprep.subr.mxu0 0.0
  %853 = vmatpush1.msra.mxu0 0.0
  %854 = vmatprep.subr.mxu0 0.0
  %855 = vmatpush1.msra.mxu0 0.0
  %856 = vmatprep.subr.mxu0 0.0
  %857 = vmatpush1.msra.mxu0 0.0
  %858 = vmatprep.subr.mxu0 0.0
  %859 = vmatpush1.msra.mxu0 0.0
  %860 = vmatprep.subr.mxu0 0.0
  %861 = vmatpush1.msra.mxu0 0.0
  %862 = vmatprep.subr.mxu0 0.0
  %863 = vmatpush1.msra.mxu0 0.0
  %864 = vmatprep.subr.mxu0 0.0
  %865 = vmatpush1.msra.mxu0 %v706
  %866 = vmatprep.subr.mxu0 0.0
  %867 = vmatpush1.msra.mxu0 %v703
  %868 = vmatprep.subr.mxu0 0.0
  %869 = vmatpush1.msra.mxu0 %v698
  %870 = vmatprep.subr.mxu0 0.0
  %871 = vmatpush1.msra.mxu0 %v695
  %872 = vmatprep.subr.mxu0 0.0
  %873 = vmatpush2.msra.mxu0 0.0
  %874 = vmatprep.subr.mxu0 0.0
  %875 = vmatpush2.msra.mxu0 0.0
  %876 = vmatprep.subr.mxu0 0.0
  %877 = vmatpush2.msra.mxu0 0.0
  %878 = vmatprep.subr.mxu0 0.0
  %879 = vmatpush2.msra.mxu0 0.0
  %880 = vmatprep.subr.mxu0 0.0
  %881 = vmatpush2.msra.mxu0 0.0
  %882 = vmatprep.subr.mxu0 0.0
  %883 = vmatpush2.msra.mxu0 0.0
  %884 = vmatprep.subr.mxu0 0.0
  %885 = vmatpush2.msra.mxu0 0.0
  %886 = vmatprep.subr.mxu0 0.0
  %887 = vmatpush2.msra.mxu0 0.0
  %888 = vmatprep.subr.mxu0 0.0
  %889 = vmatpush2.msra.mxu0 0.0
  %890 = vmatprep.subr.mxu0 0.0
  %891 = vmatpush2.msra.mxu0 0.0
  %892 = vmatprep.subr.mxu0 0.0
  %893 = vmatpush2.msra.mxu0 0.0
  %894 = vmatprep.subr.mxu0 0.0
  %895 = vmatpush2.msra.mxu0 0.0
  %896 = vmatprep.subr.mxu0 0.0
  %897 = vmatpush2.msra.mxu0 0.0
  %898 = vmatprep.subr.mxu0 0.0
  %899 = vmatpush2.msra.mxu0 0.0
  %900 = vmatprep.subr.mxu0 0.0
  %901 = vmatpush2.msra.mxu0 0.0
  %902 = vmatprep.subr.mxu0 0.0
  %903 = vmatpush2.msra.mxu0 0.0
  %904 = vmatprep.mubr.f32.mxu0 0.0
  %905 = vmatmul.mubr.f32.gmra.mxu0 %v312
  %v906 = vpop.f32.mrf.mxu0
  %v907 = vadd.f32 0.0, %v906
  %v908 = vpop.f32.mrf.mxu0
  %909 = vmatprep.mubr.f32.mxu0 0.0
  %910 = vmatmul.mubr.f32.gmra.mxu0 %v315
  %v911 = vpop.f32.mrf.mxu0
  %v912 = vadd.f32 0.0, %v911
  %v913 = vpop.f32.mrf.mxu0
  %914 = vmatprep.mubr.f32.mxu0 0.0
  %915 = vmatmul.mubr.f32.gmra.mxu0 %v318
  %v916 = vpop.f32.mrf.mxu0
  %v917 = vadd.f32 0.0, %v916
  %v918 = vpop.f32.mrf.mxu0
  %919 = vmatprep.mubr.f32.mxu0 0.0
  %920 = vmatmul.mubr.f32.gmra.mxu0 %v321
  %v921 = vpop.f32.mrf.mxu0
  %v922 = vadd.f32 0.0, %v921
  %v923 = vpop.f32.mrf.mxu0
  %924 = vdwg.mxu0
  %v941 = vunpack.c.l.b16 %v710
  %v942 = vunpack.c.l.b16 %v711
  %v943 = vunpack.c.l.b16 %v712
  %v944 = vunpack.c.l.b16 %v713
  %v945 = vunpack.c.l.b16 %v714
  %v946 = vunpack.c.l.b16 %v715
  %v947 = vunpack.c.l.b16 %v716
  %v948 = vunpack.c.l.b16 %v717
  %v949 = vunpack.c.l.b16 %v718
  %v950 = vunpack.c.l.b16 %v719
  %v951 = vunpack.c.l.b16 %v720
  %v952 = vunpack.c.l.b16 %v721
  %v953 = vunpack.c.l.b16 %v722
  %v954 = vunpack.c.l.b16 %v723
  %v955 = vunpack.c.l.b16 %v724
  %v956 = vunpack.c.l.b16 %v725
  %v957 = vpack.c.b16 %v942, %v941
  %v958 = vpack.c.b16 %v944, %v943
  %v959 = vpack.c.b16 %v946, %v945
  %v960 = vpack.c.b16 %v948, %v947
  %v961 = vpack.c.b16 %v950, %v949
  %v962 = vpack.c.b16 %v952, %v951
  %v963 = vpack.c.b16 %v954, %v953
  %v964 = vpack.c.b16 %v956, %v955
  %973 = vmatprep.subr.bf16.mxu0 0
  %974 = vmatpush1.bf16.msra.mxu0 %v964
  %975 = vmatprep.subr.bf16.mxu0 0
  %976 = vmatpush1.bf16.msra.mxu0 %v963
  %977 = vmatprep.subr.bf16.mxu0 0
  %978 = vmatpush1.bf16.msra.mxu0 %v962
  %979 = vmatprep.subr.bf16.mxu0 0
  %980 = vmatpush1.bf16.msra.mxu0 %v961
  %981 = vmatprep.subr.bf16.mxu0 0
  %982 = vmatpush1.bf16.msra.mxu0 %v960
  %983 = vmatprep.subr.bf16.mxu0 0
  %984 = vmatpush1.bf16.msra.mxu0 %v959
  %985 = vmatprep.subr.bf16.mxu0 0
  %986 = vmatpush1.bf16.msra.mxu0 %v958
  %987 = vmatprep.subr.bf16.mxu0 0
  %988 = vmatpush1.bf16.msra.mxu0 %v957
  %989 = vmatprep.subr.bf16.mxu0 0
  %990 = vmatpush2.bf16.msra.mxu0 0
  %991 = vmatprep.subr.bf16.mxu0 0
  %992 = vmatpush2.bf16.msra.mxu0 0
  %993 = vmatprep.subr.bf16.mxu0 0
  %994 = vmatpush2.bf16.msra.mxu0 0
  %995 = vmatprep.subr.bf16.mxu0 0
  %996 = vmatpush2.bf16.msra.mxu0 0
  %997 = vmatprep.subr.bf16.mxu0 0
  %998 = vmatpush2.bf16.msra.mxu0 0
  %999 = vmatprep.subr.bf16.mxu0 0
  %1000 = vmatpush2.bf16.msra.mxu0 0
  %1001 = vmatprep.subr.bf16.mxu0 0
  %1002 = vmatpush2.bf16.msra.mxu0 0
  %1003 = vmatprep.subr.bf16.mxu0 0
  %1004 = vmatpush2.bf16.msra.mxu0 0
  %1005 = vmatprep.mubr.bf16.mxu0 0
  %1006 = vmatmul.mubr.bf16.gmra.mxu0 %v594
  %v1007 = vpop.f32.mrf.mxu0
  %v1008 = vadd.f32 %v907, %v1007
  %v1009 = vpop.f32.mrf.mxu0
  %v1010 = vpop.f32.mrf.mxu0
  %v1011 = vadd.f32 %v912, %v1010
  %v1012 = vpop.f32.mrf.mxu0
  %1013 = vmatprep.mubr.bf16.mxu0 0
  %1014 = vmatmul.mubr.bf16.gmra.mxu0 %v595
  %v1015 = vpop.f32.mrf.mxu0
  %v1016 = vadd.f32 %v917, %v1015
  %v1017 = vpop.f32.mrf.mxu0
  %v1018 = vpop.f32.mrf.mxu0
  %v1019 = vadd.f32 %v922, %v1018
  %v1020 = vpop.f32.mrf.mxu0
  %1021 = vdwg.mxu0
  %1022 = vmatprep.subr.mxu0 0.0
  %1023 = vmatpush1.msra.mxu0 0.0
  %1024 = vmatprep.subr.mxu0 0.0
  %1025 = vmatpush1.msra.mxu0 0.0
  %1026 = vmatprep.subr.mxu0 0.0
  %1027 = vmatpush1.msra.mxu0 0.0
  %1028 = vmatprep.subr.mxu0 0.0
  %1029 = vmatpush1.msra.mxu0 0.0
  %1030 = vmatprep.subr.mxu0 0.0
  %1031 = vmatpush1.msra.mxu0 0.0
  %1032 = vmatprep.subr.mxu0 0.0
  %1033 = vmatpush1.msra.mxu0 0.0
  %1034 = vmatprep.subr.mxu0 0.0
  %1035 = vmatpush1.msra.mxu0 0.0
  %1036 = vmatprep.subr.mxu0 0.0
  %1037 = vmatpush1.msra.mxu0 0.0
  %1038 = vmatprep.subr.mxu0 0.0
  %1039 = vmatpush1.msra.mxu0 0.0
  %1040 = vmatprep.subr.mxu0 0.0
  %1041 = vmatpush1.msra.mxu0 0.0
  %1042 = vmatprep.subr.mxu0 0.0
  %1043 = vmatpush1.msra.mxu0 0.0
  %1044 = vmatprep.subr.mxu0 0.0
  %1045 = vmatpush1.msra.mxu0 0.0
  %1046 = vmatprep.subr.mxu0 0.0
  %1047 = vmatpush1.msra.mxu0 %v837
  %1048 = vmatprep.subr.mxu0 0.0
  %1049 = vmatpush1.msra.mxu0 %v834
  %1050 = vmatprep.subr.mxu0 0.0
  %1051 = vmatpush1.msra.mxu0 %v829
  %1052 = vmatprep.subr.mxu0 0.0
  %1053 = vmatpush1.msra.mxu0 %v826
  %1054 = vmatprep.subr.mxu0 0.0
  %1055 = vmatpush2.msra.mxu0 0.0
  %1056 = vmatprep.subr.mxu0 0.0
  %1057 = vmatpush2.msra.mxu0 0.0
  %1058 = vmatprep.subr.mxu0 0.0
  %1059 = vmatpush2.msra.mxu0 0.0
  %1060 = vmatprep.subr.mxu0 0.0
  %1061 = vmatpush2.msra.mxu0 0.0
  %1062 = vmatprep.subr.mxu0 0.0
  %1063 = vmatpush2.msra.mxu0 0.0
  %1064 = vmatprep.subr.mxu0 0.0
  %1065 = vmatpush2.msra.mxu0 0.0
  %1066 = vmatprep.subr.mxu0 0.0
  %1067 = vmatpush2.msra.mxu0 0.0
  %1068 = vmatprep.subr.mxu0 0.0
  %1069 = vmatpush2.msra.mxu0 0.0
  %1070 = vmatprep.subr.mxu0 0.0
  %1071 = vmatpush2.msra.mxu0 0.0
  %1072 = vmatprep.subr.mxu0 0.0
  %1073 = vmatpush2.msra.mxu0 0.0
  %1074 = vmatprep.subr.mxu0 0.0
  %1075 = vmatpush2.msra.mxu0 0.0
  %1076 = vmatprep.subr.mxu0 0.0
  %1077 = vmatpush2.msra.mxu0 0.0
  %1078 = vmatprep.subr.mxu0 0.0
  %1079 = vmatpush2.msra.mxu0 0.0
  %1080 = vmatprep.subr.mxu0 0.0
  %1081 = vmatpush2.msra.mxu0 0.0
  %1082 = vmatprep.subr.mxu0 0.0
  %1083 = vmatpush2.msra.mxu0 0.0
  %1084 = vmatprep.subr.mxu0 0.0
  %1085 = vmatpush2.msra.mxu0 0.0
  %1086 = vmatprep.mubr.f32.mxu0 0.0
  %1087 = vmatmul.mubr.f32.gmra.mxu0 %v482
  %v1088 = vpop.f32.mrf.mxu0
  %v1089 = vadd.f32 0.0, %v1088
  %v1090 = vpop.f32.mrf.mxu0
  %1091 = vmatprep.mubr.f32.mxu0 0.0
  %1092 = vmatmul.mubr.f32.gmra.mxu0 %v485
  %v1093 = vpop.f32.mrf.mxu0
  %v1094 = vadd.f32 0.0, %v1093
  %v1095 = vpop.f32.mrf.mxu0
  %1096 = vmatprep.mubr.f32.mxu0 0.0
  %1097 = vmatmul.mubr.f32.gmra.mxu0 %v488
  %v1098 = vpop.f32.mrf.mxu0
  %v1099 = vadd.f32 0.0, %v1098
  %v1100 = vpop.f32.mrf.mxu0
  %1101 = vmatprep.mubr.f32.mxu0 0.0
  %1102 = vmatmul.mubr.f32.gmra.mxu0 %v491
  %v1103 = vpop.f32.mrf.mxu0
  %v1104 = vadd.f32 0.0, %v1103
  %v1105 = vpop.f32.mrf.mxu0
  %1106 = vdwg.mxu0
  %v1107 = vadd.f32 %v1008, %v1089
  %v1108 = vadd.f32 %v1011, %v1094
  %v1109 = vadd.f32 %v1016, %v1099
  %v1110 = vadd.f32 %v1019, %v1104
  %v1111 = vld [vmem:[%s3] sm:$0xf]
  %v1112 = vld [vmem:[%s3 + $0x4] sm:$0xf]
  %v1113 = vld [vmem:[%s3 + $0x8] sm:$0xf]
  %v1114 = vld [vmem:[%s3 + $0xc] sm:$0xf]
  %v1115 = vld [vmem:[%s3 + $0x10] sm:$0xf]
  %v1116 = vld [vmem:[%s3 + $0x14] sm:$0xf]
  %v1117 = vld [vmem:[%s3 + $0x18] sm:$0xf]
  %v1118 = vld [vmem:[%s3 + $0x1c] sm:$0xf]
  %v1127 = vunpack.c.l.b16 %v1111
  %v1128 = vunpack.c.l.b16 %v1112
  %v1129 = vunpack.c.l.b16 %v1113
  %v1130 = vunpack.c.l.b16 %v1114
  %v1131 = vunpack.c.l.b16 %v1115
  %v1132 = vunpack.c.l.b16 %v1116
  %v1133 = vunpack.c.l.b16 %v1117
  %v1134 = vunpack.c.l.b16 %v1118
  %v1135 = vpack.c.b16 %v1128, %v1127
  %v1136 = vpack.c.b16 %v1130, %v1129
  %v1137 = vpack.c.b16 %v1132, %v1131
  %v1138 = vpack.c.b16 %v1134, %v1133
  %1143 = vmatprep.subr.bf16.mxu0 0
  %1144 = vmatpush1.bf16.msra.mxu0 0
  %1145 = vmatprep.subr.bf16.mxu0 0
  %1146 = vmatpush1.bf16.msra.mxu0 0
  %1147 = vmatprep.subr.bf16.mxu0 0
  %1148 = vmatpush1.bf16.msra.mxu0 0
  %1149 = vmatprep.subr.bf16.mxu0 0
  %1150 = vmatpush1.bf16.msra.mxu0 0
  %1151 = vmatprep.subr.bf16.mxu0 0
  %1152 = vmatpush1.bf16.msra.mxu0 %v1138
  %1153 = vmatprep.subr.bf16.mxu0 0
  %1154 = vmatpush1.bf16.msra.mxu0 %v1137
  %1155 = vmatprep.subr.bf16.mxu0 0
  %1156 = vmatpush1.bf16.msra.mxu0 %v1136
  %1157 = vmatprep.subr.bf16.mxu0 0
  %1158 = vmatpush1.bf16.msra.mxu0 %v1135
  %1159 = vmatprep.subr.bf16.mxu0 0
  %1160 = vmatpush2.bf16.msra.mxu0 0
  %1161 = vmatprep.subr.bf16.mxu0 0
  %1162 = vmatpush2.bf16.msra.mxu0 0
  %1163 = vmatprep.subr.bf16.mxu0 0
  %1164 = vmatpush2.bf16.msra.mxu0 0
  %1165 = vmatprep.subr.bf16.mxu0 0
  %1166 = vmatpush2.bf16.msra.mxu0 0
  %1167 = vmatprep.subr.bf16.mxu0 0
  %1168 = vmatpush2.bf16.msra.mxu0 0
  %1169 = vmatprep.subr.bf16.mxu0 0
  %1170 = vmatpush2.bf16.msra.mxu0 0
  %1171 = vmatprep.subr.bf16.mxu0 0
  %1172 = vmatpush2.bf16.msra.mxu0 0
  %1173 = vmatprep.subr.bf16.mxu0 0
  %1174 = vmatpush2.bf16.msra.mxu0 0
  %1175 = vmatprep.mubr.bf16.mxu0 0
  %1176 = vmatmul.mubr.bf16.gmra.mxu0 %v165
  %v1177 = vpop.f32.mrf.mxu0
  %v1178 = vadd.f32 0.0, %v1177
  %v1179 = vpop.f32.mrf.mxu0
  %v1180 = vpop.f32.mrf.mxu0
  %v1181 = vadd.f32 0.0, %v1180
  %v1182 = vpop.f32.mrf.mxu0
  %1183 = vmatprep.mubr.bf16.mxu0 0
  %1184 = vmatmul.mubr.bf16.gmra.mxu0 %v168
  %v1185 = vpop.f32.mrf.mxu0
  %v1186 = vadd.f32 0.0, %v1185
  %v1187 = vpop.f32.mrf.mxu0
  %v1188 = vpop.f32.mrf.mxu0
  %v1189 = vadd.f32 0.0, %v1188
  %v1190 = vpop.f32.mrf.mxu0
  %1191 = vdwg.mxu0
  %v1192 = vadd.f32 %v1107, %v1178
  %v1193 = vadd.f32 %v1108, %v1181
  %v1194 = vadd.f32 %v1109, %v1186
  %v1195 = vadd.f32 %v1110, %v1189
  %v1196 = vlaneseq
  %v1197 = vshrl.u32 %v1196, 7
  %v1198 = vsub.s32 1, %v1197
  %v1199 = vrot.slane %v25, %v1198
  %v1200 = vadd.f32 %v1192, %v1199
  %v1201 = vadd.f32 %v1193, %v1199
  %v1202 = vadd.f32 %v1194, %v1199
  %v1203 = vadd.f32 %v1195, %v1199
  %1204 = vst [vmem:[%s5] sm:$0xff] %v1200
  %1205 = vst [vmem:[%s5 + $0x8] sm:$0xff] %v1201
  %1206 = vst [vmem:[%s5 + $0x10] sm:$0xff] %v1202
  %1207 = vst [vmem:[%s5 + $0x18] sm:$0xff] %v1203
  // Predicated region
  $region22: #{basic_block_forward.1} parent=0 // pred_check
    _
  $region23: #{basic_block_forward.1} parent=0 // pred_check_branch
    %1209 = sbr.rel (0) target = $region25
  $region24: #{basic_block_forward.1} parent=0 // pred_region
    _
  $region25: #{basic_block_forward.1} parent=0 // pred_fallthru
    _
  // Predicated region
  $region26: #{basic_block_forward.1} parent=0 // pred_check
    _
  $region27: #{basic_block_forward.1} parent=0 // pred_check_branch
    %1211 = sbr.rel (0) target = $region29
  $region28: #{basic_block_forward.1} parent=0 // pred_region
    _
  $region29: #{basic_block_forward.1} parent=0 // pred_fallthru
    _

</llo_original>
